<compile_context>
chip_gen: v5e
topology: v5e:2x2
jax: 0.10.0
libtpu: 0.0.40
codegen_flags: <defaults>
</compile_context>

<pallas_src>
import jax
import jax.numpy as jnp
from jax import lax
from jax.experimental import pallas as pl
from jax.experimental.pallas import tpu as pltpu

_EPS = 1e-5
_K = 7        # Conv1d kernel_size
_PAD = 1      # Conv1d padding
_PADL = 2     # zero columns in front of batch 0 (covers conv1/conv2 left reads)
_GAP = 8      # zero columns between packed batch segments (>= 1 required)


def _round_up(x, m):
    return ((x + m - 1) // m) * m


def _vmem_budget_bytes():
    """Usable single-shot VMEM budget for this chip (85% of physical)."""
    try:
        cap = int(pltpu.get_tpu_info().vmem_capacity_bytes)
    except Exception:
        cap = 64 * 2 ** 20          # conservative: smallest per-core VMEM (v7x)
    return max(32 * 2 ** 20, int(cap * 0.85))


def _conv7(x2d, w_ref, out_w, fold):
    """7-tap 1-D conv over a lane-major activation slab.

    fold=True : concatenate the 7 shifted views along the Cin (sublane) axis
                and run ONE (Cout, 7*Cin) x (7*Cin, out_w) MXU matmul.
    fold=False: per-tap (Cout, Cin) x (Cin, out_w) matmuls + f32 adds
                (fallback for channel counts that are not 8-row aligned)."""
    if fold:
        a = jnp.concatenate([x2d[:, k:k + out_w] for k in range(_K)], axis=0)
        return jnp.dot(w_ref[...], a, preferred_element_type=jnp.float32)
    acc = None
    for k in range(_K):
        t = jnp.dot(w_ref[k], x2d[:, k:k + out_w],
                    preferred_element_type=jnp.float32)
        acc = t if acc is None else acc + t
    return acc


def _bn_scale_bias(y, mask, count, gamma, beta):
    """Training-mode BatchNorm1d folded into one per-channel scale & bias.

    One-pass masked sum / sum-of-squares (biased variance); the masked value
    is computed once and reused for both reductions."""
    ym = y * mask
    inv_n = 1.0 / count
    s = jnp.sum(ym, axis=1, keepdims=True)
    ss = jnp.sum(ym * y, axis=1, keepdims=True)
    mean = s * inv_n
    var = jnp.maximum(ss * inv_n - mean * mean, 0.0)
    scale = gamma * lax.rsqrt(var + _EPS)
    bias = beta - mean * scale
    return scale, bias


def basic_block7x7(x, w1, w2, g1, b1, g2, b2, *, compute_dtype=jnp.bfloat16):
    N, C, L = x.shape
    P = w1.shape[0]
    assert w1.shape == (P, C, _K) and w2.shape == (P, P, _K)
    assert C == P, "residual add requires inplanes7 == planes when downsample is None"
    assert L >= 9, "block output length L-8 must be positive"
    # TODO(synk): stride>1 / downsample branch of BasicBlock7x7 not implemented
    # (default constructor arguments stride=1, downsample=None are covered).

    L1 = L + 2 * _PAD - _K + 1            # conv1 output length  (L - 4)
    L2 = L1 + 2 * _PAD - _K + 1           # conv2 output length  (L - 8)

    T = L + _GAP                          # per-batch pitch in the lane axis
    W_out = _round_up(_PADL + N * T, 128)  # lane-dense output / conv2 width
    W_h = W_out + (_K - 1)                # conv1/h width needed by conv2's taps
    W_in = W_out + 128                    # input slab width (room for conv1 taps)

    f32 = jnp.float32
    cdt = jnp.dtype(compute_dtype)

    fold1 = (C % 8 == 0)
    fold2 = (P % 8 == 0)

    # ------------------------- host-side layout --------------------------
    xt = jnp.transpose(x.astype(f32), (1, 0, 2))             # (C, N, L)
    xt = jnp.pad(xt, ((0, 0), (0, 0), (0, T - L)))            # (C, N, T)
    flat = xt.reshape(C, N * T)
    # conv slab (compute dtype):  x[n, c, l] -> column _PADL + n*T + l
    x_slab = jnp.pad(flat, ((0, 0), (_PADL, W_in - _PADL - N * T))).astype(cdt)
    # residual slab (f32), pre-aligned with y2/output columns:
    #   x[n, c, l] -> column n*T + l  (offset-0, lane-aligned read in-kernel)
    r_slab = jnp.pad(flat, ((0, 0), (0, W_out - N * T)))

    # MXU-ready weights.
    if fold1:
        w1k = jnp.transpose(w1, (0, 2, 1)).reshape(P, _K * C).astype(cdt)  # (P, 7C)
    else:
        w1k = jnp.transpose(w1, (2, 0, 1)).astype(cdt)                     # (K, P, C)
    if fold2:
        w2k = jnp.transpose(w2, (0, 2, 1)).reshape(P, _K * P).astype(cdt)  # (P, 7P)
    else:
        w2k = jnp.transpose(w2, (2, 0, 1)).astype(cdt)                     # (K, P, P)

    g1c = jnp.reshape(g1, (P, 1)).astype(f32)
    b1c = jnp.reshape(b1, (P, 1)).astype(f32)
    g2c = jnp.reshape(g2, (P, 1)).astype(f32)
    b2c = jnp.reshape(b2, (P, 1)).astype(f32)

    # Validity masks (host-built: avoids in-kernel vector integer division by
    # the non-power-of-two pitch T).  mask1 also doubles as conv2's zero pad.
    colh = jnp.arange(W_h)
    q1 = colh - (_PADL - 1)
    mask1 = ((q1 >= 0) & (q1 < N * T) & ((q1 % T) < L1)).astype(f32)[None, :]
    colo = jnp.arange(W_out)
    mask2 = ((colo < N * T) & ((colo % T) < L2)).astype(f32)[None, :]

    cnt1 = float(N * L1)
    cnt2 = float(N * L2)

    def kernel(x_hbm, r_hbm, w1_ref, w2_ref, g1_ref, b1_ref, g2_ref, b2_ref,
               m1_ref, m2_ref, out_ref, x_vmem, r_vmem, sem):
        # Single-buffered manual DMAs (grid=(1,) has nothing to pipeline).  The
        # residual copy is waited on only right before the final add, so it is
        # hidden under the conv/BN compute.
        cp_x = pltpu.make_async_copy(x_hbm, x_vmem, sem.at[0])
        cp_r = pltpu.make_async_copy(r_hbm, r_vmem, sem.at[1])
        cp_x.start()
        cp_r.start()
        cp_x.wait()

        x_c = x_vmem[...]                          # (C, W_in) compute dtype
        m1 = m1_ref[...]
        m2 = m2_ref[...]

        # conv1 (one deep matmul) -> fused BN1 -> relu.  The mask zeroes the
        # pad / inter-batch garbage, which simultaneously provides conv2's
        # zero padding.
        y1 = _conv7(x_c, w1_ref, W_h, fold1)                       # (P, W_h) f32
        sc1, bi1 = _bn_scale_bias(y1, m1, cnt1, g1_ref[...], b1_ref[...])
        h = jnp.maximum(y1 * sc1 + bi1, 0.0) * m1

        # conv2 (one deep matmul) -> fused BN2.
        y2 = _conv7(h.astype(cdt), w2_ref, W_out, fold2)           # (P, W_out) f32
        sc2, bi2 = _bn_scale_bias(y2, m2, cnt2, g2_ref[...], b2_ref[...])

        # Residual add + relu; residual slab is pre-aligned with y2's columns.
        cp_r.wait()
        out_ref[...] = jnp.maximum(r_vmem[...] + y2 * sc2 + bi2, 0.0)

    small = (w1k, w2k, g1c, b1c, g2c, b2c, mask1, mask2)

    def _full(a):
        return pl.BlockSpec(a.shape, lambda i, nd=a.ndim: (0,) * nd)

    in_specs = ([pl.BlockSpec(memory_space=pl.ANY),     # conv slab (manual DMA)
                 pl.BlockSpec(memory_space=pl.ANY)]     # residual slab (manual DMA)
                + [_full(a) for a in small])

    # VMEM working-set estimate (single-buffered activations + pipelined output
    # and params + matmul operands + f32 temps).
    ic = cdt.itemsize
    est = int(
        ic * C * W_in                           # conv slab scratch
        + 4 * C * W_out                         # residual slab scratch
        + 2 * 4 * P * W_out                     # pipelined output (double buffer)
        + 2 * ic * _K * P * (C + P)             # weights (double buffer)
        + 2 * 4 * (4 * P + W_h + W_out)         # BN params + masks (double buffer)
        + (ic * _K * C * W_h if fold1 else 0)   # conv1 stacked operand
        + (ic * _K * P * W_out if fold2 else 0)  # conv2 stacked operand
        + 4 * P * (3 * W_h + 3 * W_out)         # y1/h + y2/bn f32 temps
        + ic * P * W_h)                         # h in compute dtype
    budget = _vmem_budget_bytes()
    if est > budget:
        # TODO(synk): tiled two-phase-BN grid (with a parallel axis so v7x's two
        # TensorCores share the work) for slabs that do not fit a single shot.
        raise ValueError(
            f"BasicBlock7x7 single-shot working set (~{est / 2**20:.1f} MiB) "
            f"exceeds the VMEM budget ({budget / 2**20:.1f} MiB) on this chip")
    vmem_limit = int(min(budget, max(32 * 2 ** 20, int(1.25 * est))))

    grid_spec = pltpu.PrefetchScalarGridSpec(
        num_scalar_prefetch=0,
        grid=(1,),
        in_specs=in_specs,
        out_specs=pl.BlockSpec((P, W_out), lambda i: (0, 0)),
        scratch_shapes=[pltpu.VMEM((C, W_in), cdt),
                        pltpu.VMEM((C, W_out), f32),
                        pltpu.SemaphoreType.DMA((2,))])

    out2d = pl.pallas_call(
        kernel,
        out_shape=jax.ShapeDtypeStruct((P, W_out), f32),
        grid_spec=grid_spec,
        compiler_params=pltpu.CompilerParams(
            dimension_semantics=("arbitrary",),
            vmem_limit_bytes=vmem_limit),
    )(x_slab, r_slab, *small)

    # Lane-dense store; host-side un-packing: column n*T + m -> (n, :, m), m < L2.
    out = out2d[:, :N * T].reshape(P, N, T)[:, :, :L2]
    return jnp.transpose(out, (1, 0, 2))


# --------------------------- pure-JAX reference ---------------------------

def _bn_ref(y, gamma, beta):
    mean = jnp.mean(y, axis=(0, 2), keepdims=True)
    var = jnp.mean((y - mean) ** 2, axis=(0, 2), keepdims=True)
    return ((y - mean) * lax.rsqrt(var + _EPS) * gamma.reshape(1, -1, 1)
            + beta.reshape(1, -1, 1))


def _reference(x, w1, w2, g1, b1, g2, b2, conv_dtype=jnp.float32):
    """Mirrors the PyTorch forward (training-mode BN, biased variance)."""
    dn = ("NCH", "OIH", "NCH")

    def conv(inp, w):
        return lax.conv_general_dilated(
            inp.astype(conv_dtype), w.astype(conv_dtype), (1,),
            [(_PAD, _PAD)], dimension_numbers=dn,
            preferred_element_type=jnp.float32)

    y = conv(x, w1)
    y = _bn_ref(y, g1, b1)
    y = jnp.maximum(y, 0.0)
    y = conv(y, w2)
    y = _bn_ref(y, g2, b2)
    d = x.shape[2] - y.shape[2]
    return jnp.maximum(x[:, :, :-d] + y, 0.0)


if __name__ == "__main__":
    key = jax.random.PRNGKey(0)
    ks = jax.random.split(key, 7)

    # Small shapes consistent with the module: batch=2, channels=16, seq len=16.
    N, C, L = 2, 16, 16
    P = C  # planes == inplanes7 (required for the residual add, no downsample)

    x = jax.random.normal(ks[0], (N, C, L), jnp.float32)
    w1 = jax.random.normal(ks[1], (P, C, _K), jnp.float32) * 0.1
    w2 = jax.random.normal(ks[2], (P, P, _K), jnp.float32) * 0.1
    g1 = 1.0 + 0.1 * jax.random.normal(ks[3], (1, P, 1), jnp.float32)
    b1 = 0.1 * jax.random.normal(ks[4], (1, P, 1), jnp.float32)
    g2 = 1.0 + 0.1 * jax.random.normal(ks[5], (1, P, 1), jnp.float32)
    b2 = 0.1 * jax.random.normal(ks[6], (1, P, 1), jnp.float32)

    # Exact-precision path (f32 matmuls) against the f32 reference: validates
    # the packed layout, masks, BN folding and residual alignment.
    out32 = jax.block_until_ready(
        basic_block7x7(x, w1, w2, g1, b1, g2, b2, compute_dtype=jnp.float32))
    ref32 = _reference(x, w1, w2, g1, b1, g2, b2)
    assert out32.shape == (N, P, L - 8), out32.shape
    assert jnp.allclose(out32, ref32, atol=5e-4, rtol=5e-4), float(
        jnp.max(jnp.abs(out32 - ref32)))

    # Default path: bf16 MXU inputs with f32 accumulation / BN / residual,
    # checked against a reference whose conv inputs are quantised identically.
    outbf = jax.block_until_ready(basic_block7x7(x, w1, w2, g1, b1, g2, b2))
    refbf = _reference(x, w1, w2, g1, b1, g2, b2, conv_dtype=jnp.bfloat16)
    assert outbf.shape == (N, P, L - 8), outbf.shape
    assert jnp.allclose(outbf, refbf, atol=5e-2, rtol=5e-2), float(
        jnp.max(jnp.abs(outbf - refbf)))

    print("KERNEL_OK")
</pallas_src>

<mosaic_0001>
module attributes {stable_mosaic.version = 11 : i64} {
  func.func @kernel(%arg0: i32, %arg1: memref<16x256xf32, #tpu.memory_space<any>>, %arg2: memref<16x128xf32, #tpu.memory_space<any>>, %arg3: memref<16x112xf32, #tpu.memory_space<vmem>>, %arg4: memref<16x112xf32, #tpu.memory_space<vmem>>, %arg5: memref<16x1xf32, #tpu.memory_space<vmem>>, %arg6: memref<16x1xf32, #tpu.memory_space<vmem>>, %arg7: memref<16x1xf32, #tpu.memory_space<vmem>>, %arg8: memref<16x1xf32, #tpu.memory_space<vmem>>, %arg9: memref<1x134xf32, #tpu.memory_space<vmem>>, %arg10: memref<1x128xf32, #tpu.memory_space<vmem>>, %arg11: memref<16x128xf32, #tpu.memory_space<vmem>>, %arg12: memref<16x256xf32, #tpu.memory_space<vmem>>, %arg13: memref<16x128xf32, #tpu.memory_space<vmem>>, %arg14: memref<2x!tpu.dma_semaphore, #tpu.memory_space<semaphore_mem>>) attributes {dimension_semantics = [#tpu.dimension_semantics<arbitrary>], iteration_bounds = array<i64: 1>, scalar_prefetch = 0 : i64, scratch_operands = 3 : i64, tpu.core_type = #tpu.core_type<tc>, window_params = [{}, {}, {pipeline_mode = #tpu.pipeline_mode<synchronous>, transform_indices = @transform_2, window_bounds = array<i64: 16, 112>}, {pipeline_mode = #tpu.pipeline_mode<synchronous>, transform_indices = @transform_3, window_bounds = array<i64: 16, 112>}, {pipeline_mode = #tpu.pipeline_mode<synchronous>, transform_indices = @transform_4, window_bounds = array<i64: 16, 1>}, {pipeline_mode = #tpu.pipeline_mode<synchronous>, transform_indices = @transform_5, window_bounds = array<i64: 16, 1>}, {pipeline_mode = #tpu.pipeline_mode<synchronous>, transform_indices = @transform_6, window_bounds = array<i64: 16, 1>}, {pipeline_mode = #tpu.pipeline_mode<synchronous>, transform_indices = @transform_7, window_bounds = array<i64: 16, 1>}, {pipeline_mode = #tpu.pipeline_mode<synchronous>, transform_indices = @transform_8, window_bounds = array<i64: 1, 134>}, {pipeline_mode = #tpu.pipeline_mode<synchronous>, transform_indices = @transform_9, window_bounds = array<i64: 1, 128>}, {pipeline_mode = #tpu.pipeline_mode<synchronous>, transform_indices = @transform_10, window_bounds = array<i64: 16, 128>}]} {
    %c0_i32 = arith.constant 0 : i32
    %0 = tpu.memref_slice %arg14[%c0_i32] : memref<2x!tpu.dma_semaphore, #tpu.memory_space<semaphore_mem>> -> memref<1x!tpu.dma_semaphore, #tpu.memory_space<semaphore_mem>>
    %1 = tpu.memref_squeeze %0 : memref<1x!tpu.dma_semaphore, #tpu.memory_space<semaphore_mem>> -> memref<!tpu.dma_semaphore, #tpu.memory_space<semaphore_mem>>
    tpu.enqueue_dma source(%arg1 : memref<16x256xf32, #tpu.memory_space<any>>) target(%arg12 : memref<16x256xf32, #tpu.memory_space<vmem>>) target_semaphore(%1 : memref<!tpu.dma_semaphore, #tpu.memory_space<semaphore_mem>>)
    %c1_i32 = arith.constant 1 : i32
    %2 = tpu.memref_slice %arg14[%c1_i32] : memref<2x!tpu.dma_semaphore, #tpu.memory_space<semaphore_mem>> -> memref<1x!tpu.dma_semaphore, #tpu.memory_space<semaphore_mem>>
    %3 = tpu.memref_squeeze %2 : memref<1x!tpu.dma_semaphore, #tpu.memory_space<semaphore_mem>> -> memref<!tpu.dma_semaphore, #tpu.memory_space<semaphore_mem>>
    tpu.enqueue_dma source(%arg2 : memref<16x128xf32, #tpu.memory_space<any>>) target(%arg13 : memref<16x128xf32, #tpu.memory_space<vmem>>) target_semaphore(%3 : memref<!tpu.dma_semaphore, #tpu.memory_space<semaphore_mem>>)
    %c0_i32_0 = arith.constant 0 : i32
    %4 = tpu.memref_slice %arg14[%c0_i32_0] : memref<2x!tpu.dma_semaphore, #tpu.memory_space<semaphore_mem>> -> memref<1x!tpu.dma_semaphore, #tpu.memory_space<semaphore_mem>>
    %5 = tpu.memref_squeeze %4 : memref<1x!tpu.dma_semaphore, #tpu.memory_space<semaphore_mem>> -> memref<!tpu.dma_semaphore, #tpu.memory_space<semaphore_mem>>
    tpu.wait_dma2 semaphore(%5 : memref<!tpu.dma_semaphore, #tpu.memory_space<semaphore_mem>>) src(%arg1 : memref<16x256xf32, #tpu.memory_space<any>>) dst(%arg12 : memref<16x256xf32, #tpu.memory_space<vmem>>)
    %c0 = arith.constant 0 : index
    %c0_1 = arith.constant 0 : index
    %6 = vector.load %arg12[%c0, %c0_1] : memref<16x256xf32, #tpu.memory_space<vmem>>, vector<16x256xf32>
    %c0_2 = arith.constant 0 : index
    %c0_3 = arith.constant 0 : index
    %7 = vector.load %arg9[%c0_2, %c0_3] : memref<1x134xf32, #tpu.memory_space<vmem>>, vector<1x134xf32>
    %c0_4 = arith.constant 0 : index
    %c0_5 = arith.constant 0 : index
    %8 = vector.load %arg10[%c0_4, %c0_5] : memref<1x128xf32, #tpu.memory_space<vmem>>, vector<1x128xf32>
    %9 = vector.extract_strided_slice %6 {offsets = [0, 0], sizes = [16, 134], strides = [1, 1]} : vector<16x256xf32> to vector<16x134xf32>
    %10 = vector.extract_strided_slice %6 {offsets = [0, 1], sizes = [16, 134], strides = [1, 1]} : vector<16x256xf32> to vector<16x134xf32>
    %11 = vector.extract_strided_slice %6 {offsets = [0, 2], sizes = [16, 134], strides = [1, 1]} : vector<16x256xf32> to vector<16x134xf32>
    %12 = vector.extract_strided_slice %6 {offsets = [0, 3], sizes = [16, 134], strides = [1, 1]} : vector<16x256xf32> to vector<16x134xf32>
    %13 = vector.extract_strided_slice %6 {offsets = [0, 4], sizes = [16, 134], strides = [1, 1]} : vector<16x256xf32> to vector<16x134xf32>
    %14 = vector.extract_strided_slice %6 {offsets = [0, 5], sizes = [16, 134], strides = [1, 1]} : vector<16x256xf32> to vector<16x134xf32>
    %15 = vector.extract_strided_slice %6 {offsets = [0, 6], sizes = [16, 134], strides = [1, 1]} : vector<16x256xf32> to vector<16x134xf32>
    %16 = tpu.concatenate %9, %10, %11, %12, %13, %14, %15 in 0 : vector<16x134xf32>, vector<16x134xf32>, vector<16x134xf32>, vector<16x134xf32>, vector<16x134xf32>, vector<16x134xf32>, vector<16x134xf32> -> vector<112x134xf32>
    %c0_6 = arith.constant 0 : index
    %c0_7 = arith.constant 0 : index
    %17 = vector.load %arg3[%c0_6, %c0_7] : memref<16x112xf32, #tpu.memory_space<vmem>>, vector<16x112xf32>
    %cst = arith.constant dense<0.000000e+00> : vector<16x134xf32>
    %18 = tpu.matmul %17, %16, %cst {dimension_numbers = #tpu.dot_dimension_numbers<[1], [0], [0], [1], [0, 0, 1, 1], [], []>} : vector<16x112xf32>, vector<112x134xf32>, vector<16x134xf32> -> vector<16x134xf32>
    %c0_8 = arith.constant 0 : index
    %c0_9 = arith.constant 0 : index
    %19 = vector.load %arg5[%c0_8, %c0_9] : memref<16x1xf32, #tpu.memory_space<vmem>>, vector<16x1xf32>
    %c0_10 = arith.constant 0 : index
    %c0_11 = arith.constant 0 : index
    %20 = vector.load %arg6[%c0_10, %c0_11] : memref<16x1xf32, #tpu.memory_space<vmem>>, vector<16x1xf32>
    %21 = vector.broadcast %7 : vector<1x134xf32> to vector<16x134xf32>
    %22 = arith.mulf %18, %21 : vector<16x134xf32>
    %cst_12 = arith.constant dense<0.000000e+00> : vector<16xf32>
    %23 = vector.multi_reduction <add>, %22, %cst_12 [1] : vector<16x134xf32> to vector<16xf32>
    %24 = vector.shape_cast %23 : vector<16xf32> to vector<16x1xf32>
    %25 = arith.mulf %22, %18 : vector<16x134xf32>
    %cst_13 = arith.constant dense<0.000000e+00> : vector<16xf32>
    %26 = vector.multi_reduction <add>, %25, %cst_13 [1] : vector<16x134xf32> to vector<16xf32>
    %27 = vector.shape_cast %26 : vector<16xf32> to vector<16x1xf32>
    %cst_14 = arith.constant 0.0416666679 : f32
    %28 = vector.broadcast %cst_14 : f32 to vector<16x1xf32>
    %29 = arith.mulf %24, %28 : vector<16x1xf32>
    %cst_15 = arith.constant 0.0416666679 : f32
    %30 = vector.broadcast %cst_15 : f32 to vector<16x1xf32>
    %31 = arith.mulf %27, %30 : vector<16x1xf32>
    %32 = arith.mulf %29, %29 : vector<16x1xf32>
    %33 = arith.subf %31, %32 : vector<16x1xf32>
    %cst_16 = arith.constant 0.000000e+00 : f32
    %34 = vector.broadcast %cst_16 : f32 to vector<16x1xf32>
    %35 = arith.maximumf %33, %34 : vector<16x1xf32>
    %cst_17 = arith.constant 9.99999974E-6 : f32
    %36 = vector.broadcast %cst_17 : f32 to vector<16x1xf32>
    %37 = arith.addf %35, %36 : vector<16x1xf32>
    %38 = math.rsqrt %37 : vector<16x1xf32>
    %39 = arith.mulf %19, %38 : vector<16x1xf32>
    %40 = arith.mulf %29, %39 : vector<16x1xf32>
    %41 = arith.subf %20, %40 : vector<16x1xf32>
    %42 = vector.broadcast %39 : vector<16x1xf32> to vector<16x134xf32>
    %43 = arith.mulf %18, %42 : vector<16x134xf32>
    %44 = vector.broadcast %41 : vector<16x1xf32> to vector<16x134xf32>
    %45 = arith.addf %43, %44 : vector<16x134xf32>
    %cst_18 = arith.constant 0.000000e+00 : f32
    %46 = vector.broadcast %cst_18 : f32 to vector<16x134xf32>
    %47 = arith.maximumf %45, %46 : vector<16x134xf32>
    %48 = vector.broadcast %7 : vector<1x134xf32> to vector<16x134xf32>
    %49 = arith.mulf %47, %48 : vector<16x134xf32>
    %50 = vector.extract_strided_slice %49 {offsets = [0, 0], sizes = [16, 128], strides = [1, 1]} : vector<16x134xf32> to vector<16x128xf32>
    %51 = vector.extract_strided_slice %49 {offsets = [0, 1], sizes = [16, 128], strides = [1, 1]} : vector<16x134xf32> to vector<16x128xf32>
    %52 = vector.extract_strided_slice %49 {offsets = [0, 2], sizes = [16, 128], strides = [1, 1]} : vector<16x134xf32> to vector<16x128xf32>
    %53 = vector.extract_strided_slice %49 {offsets = [0, 3], sizes = [16, 128], strides = [1, 1]} : vector<16x134xf32> to vector<16x128xf32>
    %54 = vector.extract_strided_slice %49 {offsets = [0, 4], sizes = [16, 128], strides = [1, 1]} : vector<16x134xf32> to vector<16x128xf32>
    %55 = vector.extract_strided_slice %49 {offsets = [0, 5], sizes = [16, 128], strides = [1, 1]} : vector<16x134xf32> to vector<16x128xf32>
    %56 = vector.extract_strided_slice %49 {offsets = [0, 6], sizes = [16, 128], strides = [1, 1]} : vector<16x134xf32> to vector<16x128xf32>
    %57 = tpu.concatenate %50, %51, %52, %53, %54, %55, %56 in 0 : vector<16x128xf32>, vector<16x128xf32>, vector<16x128xf32>, vector<16x128xf32>, vector<16x128xf32>, vector<16x128xf32>, vector<16x128xf32> -> vector<112x128xf32>
    %c0_19 = arith.constant 0 : index
    %c0_20 = arith.constant 0 : index
    %58 = vector.load %arg4[%c0_19, %c0_20] : memref<16x112xf32, #tpu.memory_space<vmem>>, vector<16x112xf32>
    %cst_21 = arith.constant dense<0.000000e+00> : vector<16x128xf32>
    %59 = tpu.matmul %58, %57, %cst_21 {dimension_numbers = #tpu.dot_dimension_numbers<[1], [0], [0], [1], [0, 0, 1, 1], [], []>} : vector<16x112xf32>, vector<112x128xf32>, vector<16x128xf32> -> vector<16x128xf32>
    %c0_22 = arith.constant 0 : index
    %c0_23 = arith.constant 0 : index
    %60 = vector.load %arg7[%c0_22, %c0_23] : memref<16x1xf32, #tpu.memory_space<vmem>>, vector<16x1xf32>
    %c0_24 = arith.constant 0 : index
    %c0_25 = arith.constant 0 : index
    %61 = vector.load %arg8[%c0_24, %c0_25] : memref<16x1xf32, #tpu.memory_space<vmem>>, vector<16x1xf32>
    %62 = vector.broadcast %8 : vector<1x128xf32> to vector<16x128xf32>
    %63 = arith.mulf %59, %62 : vector<16x128xf32>
    %cst_26 = arith.constant dense<0.000000e+00> : vector<16xf32>
    %64 = vector.multi_reduction <add>, %63, %cst_26 [1] : vector<16x128xf32> to vector<16xf32>
    %65 = vector.shape_cast %64 : vector<16xf32> to vector<16x1xf32>
    %66 = arith.mulf %63, %59 : vector<16x128xf32>
    %cst_27 = arith.constant dense<0.000000e+00> : vector<16xf32>
    %67 = vector.multi_reduction <add>, %66, %cst_27 [1] : vector<16x128xf32> to vector<16xf32>
    %68 = vector.shape_cast %67 : vector<16xf32> to vector<16x1xf32>
    %cst_28 = arith.constant 6.250000e-02 : f32
    %69 = vector.broadcast %cst_28 : f32 to vector<16x1xf32>
    %70 = arith.mulf %65, %69 : vector<16x1xf32>
    %cst_29 = arith.constant 6.250000e-02 : f32
    %71 = vector.broadcast %cst_29 : f32 to vector<16x1xf32>
    %72 = arith.mulf %68, %71 : vector<16x1xf32>
    %73 = arith.mulf %70, %70 : vector<16x1xf32>
    %74 = arith.subf %72, %73 : vector<16x1xf32>
    %cst_30 = arith.constant 0.000000e+00 : f32
    %75 = vector.broadcast %cst_30 : f32 to vector<16x1xf32>
    %76 = arith.maximumf %74, %75 : vector<16x1xf32>
    %cst_31 = arith.constant 9.99999974E-6 : f32
    %77 = vector.broadcast %cst_31 : f32 to vector<16x1xf32>
    %78 = arith.addf %76, %77 : vector<16x1xf32>
    %79 = math.rsqrt %78 : vector<16x1xf32>
    %80 = arith.mulf %60, %79 : vector<16x1xf32>
    %81 = arith.mulf %70, %80 : vector<16x1xf32>
    %82 = arith.subf %61, %81 : vector<16x1xf32>
    %c1_i32_32 = arith.constant 1 : i32
    %83 = tpu.memref_slice %arg14[%c1_i32_32] : memref<2x!tpu.dma_semaphore, #tpu.memory_space<semaphore_mem>> -> memref<1x!tpu.dma_semaphore, #tpu.memory_space<semaphore_mem>>
    %84 = tpu.memref_squeeze %83 : memref<1x!tpu.dma_semaphore, #tpu.memory_space<semaphore_mem>> -> memref<!tpu.dma_semaphore, #tpu.memory_space<semaphore_mem>>
    tpu.wait_dma2 semaphore(%84 : memref<!tpu.dma_semaphore, #tpu.memory_space<semaphore_mem>>) src(%arg2 : memref<16x128xf32, #tpu.memory_space<any>>) dst(%arg13 : memref<16x128xf32, #tpu.memory_space<vmem>>)
    %c0_33 = arith.constant 0 : index
    %c0_34 = arith.constant 0 : index
    %85 = vector.load %arg13[%c0_33, %c0_34] : memref<16x128xf32, #tpu.memory_space<vmem>>, vector<16x128xf32>
    %86 = vector.broadcast %80 : vector<16x1xf32> to vector<16x128xf32>
    %87 = arith.mulf %59, %86 : vector<16x128xf32>
    %88 = arith.addf %85, %87 : vector<16x128xf32>
    %89 = vector.broadcast %82 : vector<16x1xf32> to vector<16x128xf32>
    %90 = arith.addf %88, %89 : vector<16x128xf32>
    %cst_35 = arith.constant 0.000000e+00 : f32
    %91 = vector.broadcast %cst_35 : f32 to vector<16x128xf32>
    %92 = arith.maximumf %90, %91 : vector<16x128xf32>
    %c0_36 = arith.constant 0 : index
    %c0_37 = arith.constant 0 : index
    %93 = vector.load %arg11[%c0_36, %c0_37] : memref<16x128xf32, #tpu.memory_space<vmem>>, vector<16x128xf32>
    tpu.vector_store %arg11[%c0_36, %c0_37], %92 {strides = array<i32>} : memref<16x128xf32, #tpu.memory_space<vmem>>, vector<16x128xf32>,
    return
  }
  func.func @transform_2(%arg0: i32) -> (i32, i32) {
    %c0_i32 = arith.constant 0 : i32
    %c0_i32_0 = arith.constant 0 : i32
    %c0_i32_1 = arith.constant 0 : i32
    return %c0_i32, %c0_i32_0 : i32, i32
  }
  func.func @transform_3(%arg0: i32) -> (i32, i32) {
    %c0_i32 = arith.constant 0 : i32
    %c0_i32_0 = arith.constant 0 : i32
    %c0_i32_1 = arith.constant 0 : i32
    return %c0_i32, %c0_i32_0 : i32, i32
  }
  func.func @transform_4(%arg0: i32) -> (i32, i32) {
    %c0_i32 = arith.constant 0 : i32
    %c0_i32_0 = arith.constant 0 : i32
    %c0_i32_1 = arith.constant 0 : i32
    return %c0_i32, %c0_i32_0 : i32, i32
  }
  func.func @transform_5(%arg0: i32) -> (i32, i32) {
    %c0_i32 = arith.constant 0 : i32
    %c0_i32_0 = arith.constant 0 : i32
    %c0_i32_1 = arith.constant 0 : i32
    return %c0_i32, %c0_i32_0 : i32, i32
  }
  func.func @transform_6(%arg0: i32) -> (i32, i32) {
    %c0_i32 = arith.constant 0 : i32
    %c0_i32_0 = arith.constant 0 : i32
    %c0_i32_1 = arith.constant 0 : i32
    return %c0_i32, %c0_i32_0 : i32, i32
  }
  func.func @transform_7(%arg0: i32) -> (i32, i32) {
    %c0_i32 = arith.constant 0 : i32
    %c0_i32_0 = arith.constant 0 : i32
    %c0_i32_1 = arith.constant 0 : i32
    return %c0_i32, %c0_i32_0 : i32, i32
  }
  func.func @transform_8(%arg0: i32) -> (i32, i32) {
    %c0_i32 = arith.constant 0 : i32
    %c0_i32_0 = arith.constant 0 : i32
    %c0_i32_1 = arith.constant 0 : i32
    return %c0_i32, %c0_i32_0 : i32, i32
  }
  func.func @transform_9(%arg0: i32) -> (i32, i32) {
    %c0_i32 = arith.constant 0 : i32
    %c0_i32_0 = arith.constant 0 : i32
    %c0_i32_1 = arith.constant 0 : i32
    return %c0_i32, %c0_i32_0 : i32, i32
  }
  func.func @transform_10(%arg0: i32) -> (i32, i32) {
    %c0_i32 = arith.constant 0 : i32
    %c0_i32_0 = arith.constant 0 : i32
    %c0_i32_1 = arith.constant 0 : i32
    return %c0_i32, %c0_i32_0 : i32, i32
  }
}

</mosaic_0001>

<llo_original>
// kernel: tpu_custom_call.1
$region0: #{tpu_custom_call.1}
  #allocation0 [shape = 'u32[]', space=smem, size = 0x4, offset = 0x4, fixed_abs, tag = 'smem constant byte address 0x4 - core index']
  #allocation1 [shape = 'u32[72,128]{1,0:T(1,128)}', space=vmem, size = 0x9000, scoped, tag = 'internal scratch']
  #allocation2 [shape = 'f32[16,256]{1,0:T(8,128)}', space=vmem, size = 0x4000, scoped, tag = 'scratch operand']
  #allocation3 [shape = 'f32[16,128]{1,0:T(8,128)}', space=vmem, size = 0x2000, scoped, tag = 'scratch operand']
  #allocation4 [shape = 's32[2]{0}', space=sflag, size = 0x8, scoped, tag = 'scratch operand']
  #allocation9 [shape = 's32[]', space=sflag, size = 0x4, offset = 0, fixed_abs, tag = 'sflag constant byte address 0x0 - dummy sync flag']
  #allocation10 [shape = 's32[]', space=sflag, size = 0x4, offset = 0, fixed_abs, tag = 'sflag constant byte address 0x0 - dummy sync flag']
  %s0 = inlined_call_operand.vmem [shape: f32[16,256], index: 0, kind: input, shape index: {}]
  %s1 = inlined_call_operand.vmem [shape: f32[16,128], index: 1, kind: input, shape index: {}]
  %s2 = inlined_call_operand.vmem [shape: f32[16,112], index: 2, kind: input, shape index: {}]
  %s3 = inlined_call_operand.hbm [shape: f32[16,112], index: 3, kind: input, shape index: {}]
  %s4 = inlined_call_operand.vmem [shape: f32[16,1], index: 4, kind: input, shape index: {}]
  %s5 = inlined_call_operand.vmem [shape: f32[16,1], index: 5, kind: input, shape index: {}]
  %s6 = inlined_call_operand.vmem [shape: f32[16,1], index: 6, kind: input, shape index: {}]
  %s7 = inlined_call_operand.vmem [shape: f32[16,1], index: 7, kind: input, shape index: {}]
  %s8 = inlined_call_operand.vmem [shape: f32[1,134], index: 8, kind: input, shape index: {}]
  %s9 = inlined_call_operand.vmem [shape: f32[1,128], index: 9, kind: input, shape index: {}]
  %s10 = inlined_call_operand.hbm [shape: f32[16,128], index: 10, kind: output, shape index: {}]
  %s11 = sld [smem:[#allocation0]]
  $region84: #{tpu_custom_call.1} parent=0
    _
  %s13 = ssub.s32 1, %s11
  %s14 = scalar_select 0, %s13, %s11
  $region1: #{tpu_custom_call.1} parent=0
    #allocation5 [shape = 'u8[8192]{0}', space=vmem, size = 0x2000, scoped, tag = 'input window, operand 3, single buffered']
    #allocation6 [shape = 's32[1]{0}', space=sflag, size = 0x4, scoped, tag = 'scoped memory for tpu_custom_call.1']
    #allocation7 [shape = 's32[1]{0}', space=sflag, size = 0x4, scoped, tag = 'scoped memory for tpu_custom_call.1']
    #allocation8 [shape = 'u8[8192]{0}', space=vmem, size = 0x2000, scoped, tag = 'output window, operand 0, single buffered']
    %15 = vsyncpa [#allocation6], 0
    %16 = vsyncpa [#allocation7], 0
    // Predicated region
    $region2: #{tpu_custom_call.1} parent=1 // pred_check
      _
    $region3: #{tpu_custom_call.1} parent=1 // pred_check_branch
      %18 = sbr.rel (0) target = $region5
    $region4: #{tpu_custom_call.1} parent=1 // pred_region
      _
    $region5: #{tpu_custom_call.1} parent=1 // pred_fallthru
      _
    // Predicated region
    $region6: #{tpu_custom_call.1} parent=1 // pred_check
      _
    $region7: #{tpu_custom_call.1} parent=1 // pred_check_branch
      %20 = sbr.rel (0) target = $region9
    $region8: #{tpu_custom_call.1} parent=1 // pred_region
      %22 = vsyncadd [#allocation6], 0
      %s23 = sshll.u32 %s3, 4
      %s24 = int_to_ptr.hbm [resolvable:$true] %s23
      %s25 = sshll.u32 [#allocation5], 4
      %s26 = int_to_ptr.vmem [resolvable:$true] %s25
      %31 = dma.hbm_to_vmem [thread:$0]  %s24, 256, %s26, [#allocation6], 128, 128, 8
    $region9: #{tpu_custom_call.1} parent=1 // pred_fallthru
      _
    // Predicated region
    $region10: #{tpu_custom_call.1} parent=1 // pred_check
      _
    $region11: #{tpu_custom_call.1} parent=1 // pred_check_branch
      %33 = sbr.rel (0) target = $region13
    $region12: #{tpu_custom_call.1} parent=1 // pred_region
      _
    $region13: #{tpu_custom_call.1} parent=1 // pred_fallthru
      _
    // Predicated region
    $region14: #{tpu_custom_call.1} parent=1 // pred_check
      _
    $region15: #{tpu_custom_call.1} parent=1 // pred_check_branch
      %35 = sbr.rel (0) target = $region17
    $region16: #{tpu_custom_call.1} parent=1 // pred_region
      _
    $region17: #{tpu_custom_call.1} parent=1 // pred_fallthru
      _
    // Predicated region
    $region18: #{tpu_custom_call.1} parent=1 // pred_check
      _
    $region19: #{tpu_custom_call.1} parent=1 // pred_check_branch
      %37 = sbr.rel (0) target = $region21
    $region20: #{tpu_custom_call.1} parent=1 // pred_region
      _
    $region21: #{tpu_custom_call.1} parent=1 // pred_fallthru
      _
    // Predicated region
    $region22: #{tpu_custom_call.1} parent=1 // pred_check
      _
    $region23: #{tpu_custom_call.1} parent=1 // pred_check_branch
      %39 = sbr.rel (0) target = $region25
    $region24: #{tpu_custom_call.1} parent=1 // pred_region
      _
    $region25: #{tpu_custom_call.1} parent=1 // pred_fallthru
      _
    // Predicated region
    $region26: #{tpu_custom_call.1} parent=1 // pred_check
      _
    $region27: #{tpu_custom_call.1} parent=1 // pred_check_branch
      %41 = sbr.rel (0) target = $region29
    $region28: #{tpu_custom_call.1} parent=1 // pred_region
      _
    $region29: #{tpu_custom_call.1} parent=1 // pred_fallthru
      _
    // Predicated region
    $region30: #{tpu_custom_call.1} parent=1 // pred_check
      _
    $region31: #{tpu_custom_call.1} parent=1 // pred_check_branch
      %43 = sbr.rel (0) target = $region33
    $region32: #{tpu_custom_call.1} parent=1 // pred_region
      _
    $region33: #{tpu_custom_call.1} parent=1 // pred_fallthru
      _
    // Predicated region
    $region34: #{tpu_custom_call.1} parent=1 // pred_check
      _
    $region35: #{tpu_custom_call.1} parent=1 // pred_check_branch
      %45 = sbr.rel (0) target = $region37
    $region36: #{tpu_custom_call.1} parent=1 // pred_region
      %47 = dma.done [#allocation6], 256
    $region37: #{tpu_custom_call.1} parent=1 // pred_fallthru
      _
    // Predicated region
    $region38: #{tpu_custom_call.1} parent=1 // pred_check
      _
    $region39: #{tpu_custom_call.1} parent=1 // pred_check_branch
      %49 = sbr.rel (0) target = $region41
    $region40: #{tpu_custom_call.1} parent=1 // pred_region
      loop: start=0, step=1, limit=1
      $region42: #{tpu_custom_call.1} parent=40 // loop_pre_header
        _
      $region43: #{tpu_custom_call.1} parent=40 // loop_header
        %s51 = sphi 0, %s55
        %p52 = scmp.ge.s32.totalorder %s51, 1
        %s56 = sphi %s0, %s0
        %s57 = sphi [#allocation2], [#allocation2]
      $region44: #{tpu_custom_call.1} parent=40 // loop_header_branch
        %54 = sbr.rel (%p52) target = $region48
      $region45: #{tpu_custom_call.1} parent=40 // loop_body
        %v58 = vld [vmem:[%s56] sm:$0xff]
        %59 = vst [vmem:[%s57] sm:$0xff] %v58
        %v60 = vld [vmem:[%s56 + $0x8] sm:$0xff]
        %61 = vst [vmem:[%s57 + $0x8] sm:$0xff] %v60
        %v62 = vld [vmem:[%s56 + $0x10] sm:$0xff]
        %63 = vst [vmem:[%s57 + $0x10] sm:$0xff] %v62
        %v64 = vld [vmem:[%s56 + $0x18] sm:$0xff]
        %65 = vst [vmem:[%s57 + $0x18] sm:$0xff] %v64
      $region46: #{tpu_custom_call.1} parent=40 // loop_footer
        %s55 = sadd.s32 1, %s51
      $region47: #{tpu_custom_call.1} parent=40 // loop_footer_branch
        %50 = sbr.rel target = $region43
      $region48: #{tpu_custom_call.1} parent=40 // loop_exit
        _
    $region41: #{tpu_custom_call.1} parent=1 // pred_fallthru
      _
    // Predicated region
    $region49: #{tpu_custom_call.1} parent=1 // pred_check
      _
    $region50: #{tpu_custom_call.1} parent=1 // pred_check_branch
      %67 = sbr.rel target = $region52
    $region51: #{tpu_custom_call.1} parent=1 // pred_region
      _
    $region52: #{tpu_custom_call.1} parent=1 // pred_fallthru
      _
    // Predicated region
    $region53: #{tpu_custom_call.1} parent=1 // pred_check
      _
    $region54: #{tpu_custom_call.1} parent=1 // pred_check_branch
      %70 = sbr.rel (0) target = $region56
    $region55: #{tpu_custom_call.1} parent=1 // pred_region
      %71 = vsyncadd [#allocation4], 512
    $region56: #{tpu_custom_call.1} parent=1 // pred_fallthru
      _
    %s72 = scalar_lea.sflag [#allocation4], 1
    // Predicated region
    $region57: #{tpu_custom_call.1} parent=1 // pred_check
      _
    $region58: #{tpu_custom_call.1} parent=1 // pred_check_branch
      %74 = sbr.rel (0) target = $region60
    $region59: #{tpu_custom_call.1} parent=1 // pred_region
      loop: start=0, step=1, limit=1
      $region61: #{tpu_custom_call.1} parent=59 // loop_pre_header
        _
      $region62: #{tpu_custom_call.1} parent=59 // loop_header
        %s76 = sphi 0, %s80
        %p77 = scmp.ge.s32.totalorder %s76, 1
        %s81 = sphi %s1, %s1
        %s82 = sphi [#allocation3], [#allocation3]
      $region63: #{tpu_custom_call.1} parent=59 // loop_header_branch
        %79 = sbr.rel (%p77) target = $region67
      $region64: #{tpu_custom_call.1} parent=59 // loop_body
        %v83 = vld [vmem:[%s81] sm:$0xff]
        %84 = vst [vmem:[%s82] sm:$0xff] %v83
        %v85 = vld [vmem:[%s81 + $0x8] sm:$0xff]
        %86 = vst [vmem:[%s82 + $0x8] sm:$0xff] %v85
      $region65: #{tpu_custom_call.1} parent=59 // loop_footer
        %s80 = sadd.s32 1, %s76
      $region66: #{tpu_custom_call.1} parent=59 // loop_footer_branch
        %75 = sbr.rel target = $region62
      $region67: #{tpu_custom_call.1} parent=59 // loop_exit
        _
    $region60: #{tpu_custom_call.1} parent=1 // pred_fallthru
      _
    // Predicated region
    $region68: #{tpu_custom_call.1} parent=1 // pred_check
      _
    $region69: #{tpu_custom_call.1} parent=1 // pred_check_branch
      %88 = sbr.rel target = $region71
    $region70: #{tpu_custom_call.1} parent=1 // pred_region
      _
    $region71: #{tpu_custom_call.1} parent=1 // pred_fallthru
      _
    // Predicated region
    $region72: #{tpu_custom_call.1} parent=1 // pred_check
      _
    $region73: #{tpu_custom_call.1} parent=1 // pred_check_branch
      %91 = sbr.rel (0) target = $region75
    $region74: #{tpu_custom_call.1} parent=1 // pred_region
      %92 = vsyncadd %s72, 256
    $region75: #{tpu_custom_call.1} parent=1 // pred_fallthru
      _
    %s93 = smul.u32 8, 2
    %s94 = smul.u32 %s93, 2
    %s95 = sshll.u32 %s94, 4
    %96 = dma.done [#allocation4], %s95
    %v97 = vld [vmem:[#allocation2] sm:$0xff]
    %v98 = vld [vmem:[#allocation2 + $0x8] sm:$0xff]
    %v99 = vld [vmem:[#allocation2 + $0x10] sm:$0xff]
    %v100 = vld [vmem:[#allocation2 + $0x18] sm:$0xff]
    %v101 = vld [vmem:[%s8] sm:$0x3]
    %v102 = vld [vmem:[%s9] sm:$0x1]
    %107 = vrot.lane.b32.xlu0 %v97, 127
    %v108 = vpop.permute.xlu0 %107
    %109 = vrot.lane.b32.xlu0 %v98, 127
    %v110 = vpop.permute.xlu0 %109
    %111 = vrot.lane.b32.xlu0 %v99, 127
    %v112 = vpop.permute.xlu0 %111
    %113 = vrot.lane.b32.xlu0 %v100, 127
    %v114 = vpop.permute.xlu0 %113
    %vm115 = vcmask 1039360
    %v116 = vsel %vm115, %v108, %v110
    %v117 = vsel %vm115, %v112, %v114
    %122 = vrot.lane.b32.xlu0 %v97, 126
    %v123 = vpop.permute.xlu0 %122
    %124 = vrot.lane.b32.xlu0 %v98, 126
    %v125 = vpop.permute.xlu0 %124
    %126 = vrot.lane.b32.xlu0 %v99, 126
    %v127 = vpop.permute.xlu0 %126
    %128 = vrot.lane.b32.xlu0 %v100, 126
    %v129 = vpop.permute.xlu0 %128
    %vm130 = vcmask 1031168
    %v131 = vsel %vm130, %v123, %v125
    %v132 = vsel %vm130, %v127, %v129
    %137 = vrot.lane.b32.xlu0 %v97, 125
    %v138 = vpop.permute.xlu0 %137
    %139 = vrot.lane.b32.xlu0 %v98, 125
    %v140 = vpop.permute.xlu0 %139
    %141 = vrot.lane.b32.xlu0 %v99, 125
    %v142 = vpop.permute.xlu0 %141
    %143 = vrot.lane.b32.xlu0 %v100, 125
    %v144 = vpop.permute.xlu0 %143
    %vm145 = vcmask 1022976
    %v146 = vsel %vm145, %v138, %v140
    %v147 = vsel %vm145, %v142, %v144
    %152 = vrot.lane.b32.xlu0 %v97, 124
    %v153 = vpop.permute.xlu0 %152
    %154 = vrot.lane.b32.xlu0 %v98, 124
    %v155 = vpop.permute.xlu0 %154
    %156 = vrot.lane.b32.xlu0 %v99, 124
    %v157 = vpop.permute.xlu0 %156
    %158 = vrot.lane.b32.xlu0 %v100, 124
    %v159 = vpop.permute.xlu0 %158
    %vm160 = vcmask 1014784
    %v161 = vsel %vm160, %v153, %v155
    %v162 = vsel %vm160, %v157, %v159
    %167 = vrot.lane.b32.xlu0 %v97, 123
    %v168 = vpop.permute.xlu0 %167
    %169 = vrot.lane.b32.xlu0 %v98, 123
    %v170 = vpop.permute.xlu0 %169
    %171 = vrot.lane.b32.xlu0 %v99, 123
    %v172 = vpop.permute.xlu0 %171
    %173 = vrot.lane.b32.xlu0 %v100, 123
    %v174 = vpop.permute.xlu0 %173
    %vm175 = vcmask 1006592
    %v176 = vsel %vm175, %v168, %v170
    %v177 = vsel %vm175, %v172, %v174
    %182 = vrot.lane.b32.xlu0 %v97, 122
    %v183 = vpop.permute.xlu0 %182
    %184 = vrot.lane.b32.xlu0 %v98, 122
    %v185 = vpop.permute.xlu0 %184
    %186 = vrot.lane.b32.xlu0 %v99, 122
    %v187 = vpop.permute.xlu0 %186
    %188 = vrot.lane.b32.xlu0 %v100, 122
    %v189 = vpop.permute.xlu0 %188
    %vm190 = vcmask 998400
    %v191 = vsel %vm190, %v183, %v185
    %v192 = vsel %vm190, %v187, %v189
    %v197 = vld [vmem:[%s2] sm:$0xff]
    %v198 = vld [vmem:[%s2 + $0x8] sm:$0xff]
    %vm199 = vcmask 916480
    %v201 = vsel %vm199, %v197, 0
    %v204 = vsel %vm199, %v198, 0
    %206 = vmatpush.msra.mxu0 0.0
    %207 = vmatpush.msra.mxu0 0.0
    %208 = vmatpush.msra.mxu0 %v192
    %209 = vmatpush.msra.mxu0 %v191
    %210 = vmatpush.msra.mxu0 %v177
    %211 = vmatpush.msra.mxu0 %v176
    %212 = vmatpush.msra.mxu0 %v162
    %213 = vmatpush.msra.mxu0 %v161
    %214 = vmatpush.msra.mxu0 %v147
    %215 = vmatpush.msra.mxu0 %v146
    %216 = vmatpush.msra.mxu0 %v132
    %217 = vmatpush.msra.mxu0 %v131
    %218 = vmatpush.msra.mxu0 %v117
    %219 = vmatpush.msra.mxu0 %v116
    %220 = vmatpush.msra.mxu0 %v99
    %221 = vmatpush.msra.mxu0 %v97
    %222 = vmatmul.f32.gmra.mxu0 %v201
    %v223 = vpop.f32.mrf.mxu0
    %v224 = vadd.f32 0.0, %v223
    %225 = vmatmul.f32.gmra.mxu0 %v204
    %v226 = vpop.f32.mrf.mxu0
    %v227 = vadd.f32 0.0, %v226
    %228 = vdwg.mxu0
    %229 = vmatpush.msra.mxu0 0.0
    %230 = vmatpush.msra.mxu0 0.0
    %231 = vmatpush.msra.mxu0 %v189
    %232 = vmatpush.msra.mxu0 %v185
    %233 = vmatpush.msra.mxu0 %v174
    %234 = vmatpush.msra.mxu0 %v170
    %235 = vmatpush.msra.mxu0 %v159
    %236 = vmatpush.msra.mxu0 %v155
    %237 = vmatpush.msra.mxu0 %v144
    %238 = vmatpush.msra.mxu0 %v140
    %239 = vmatpush.msra.mxu0 %v129
    %240 = vmatpush.msra.mxu0 %v125
    %241 = vmatpush.msra.mxu0 %v114
    %242 = vmatpush.msra.mxu0 %v110
    %243 = vmatpush.msra.mxu0 %v100
    %244 = vmatpush.msra.mxu0 %v98
    %245 = vmatmul.f32.gmra.mxu0 %v201
    %v246 = vpop.f32.mrf.mxu0
    %v247 = vadd.f32 0.0, %v246
    %248 = vmatmul.f32.gmra.mxu0 %v204
    %v249 = vpop.f32.mrf.mxu0
    %v250 = vadd.f32 0.0, %v249
    %251 = vdwg.mxu0
    %v252 = vld [vmem:[%s4] sm:$0xff]
    %v253 = vld [vmem:[%s4 + $0x8] sm:$0xff]
    %v254 = vld [vmem:[%s5] sm:$0xff]
    %v255 = vld [vmem:[%s5 + $0x8] sm:$0xff]
    %v257 = vperm.slane %v101, 0
    %v258 = vperm.slane %v101, 1
    %v261 = vmul.f32 %v224, %v257
    %v262 = vmul.f32 %v247, %v258
    %v263 = vmul.f32 %v227, %v257
    %v264 = vmul.f32 %v250, %v258
    %vm265 = vcmask 48128
    %v266 = vsel %vm265, %v262, 0.0
    %v267 = vadd.f32 %v261, %v266
    %268 = vadd.xlane.f32.xlu0 %v267
    %v269 = vpop.xlane.xlu0 %268
    %v270 = vsel %vm265, %v264, 0.0
    %v271 = vadd.f32 %v263, %v270
    %272 = vadd.xlane.f32.xlu0 %v271
    %v273 = vpop.xlane.xlu0 %272
    %v274 = vmul.f32 %v261, %v224
    %v275 = vmul.f32 %v262, %v247
    %v276 = vmul.f32 %v263, %v227
    %v277 = vmul.f32 %v264, %v250
    %v278 = vsel %vm265, %v275, 0.0
    %v279 = vadd.f32 %v274, %v278
    %280 = vadd.xlane.f32.xlu0 %v279
    %v281 = vpop.xlane.xlu0 %280
    %v282 = vsel %vm265, %v277, 0.0
    %v283 = vadd.f32 %v276, %v282
    %284 = vadd.xlane.f32.xlu0 %v283
    %v285 = vpop.xlane.xlu0 %284
    %v286 = vmul.f32 %v269, 0.041666668
    %v287 = vmul.f32 %v273, 0.041666668
    %v288 = vmul.f32 %v281, 0.041666668
    %v289 = vmul.f32 %v285, 0.041666668
    %v290 = vmul.f32 %v286, %v286
    %v291 = vmul.f32 %v287, %v287
    %v292 = vsub.f32 %v288, %v290
    %v293 = vsub.f32 %v289, %v291
    %v294 = vmax.f32 %v292, 0.0
    %v295 = vmax.f32 %v293, 0.0
    %v296 = vadd.f32 %v294, 1e-05
    %v297 = vadd.f32 %v295, 1e-05
    %v298 = vrsqrt.pop %v296
    %v299 = vmul.f32 %v298, %v296
    %v300 = vmul.f32 %v299, %v298
    %v301 = vmul.f32 0.5, %v300
    %v302 = vsub.f32 1.5, %v301
    %v303 = vmul.f32 %v298, %v302
    %vm304 = vweird.f32 %v296
    %vm305 = vweird.f32 %v298
    %vm306 = vmor %vm304, %vm305
    %v307 = vsel %vm306, %v298, %v303
    %v308 = vrsqrt.pop %v297
    %v309 = vmul.f32 %v308, %v297
    %v310 = vmul.f32 %v309, %v308
    %v311 = vmul.f32 0.5, %v310
    %v312 = vsub.f32 1.5, %v311
    %v313 = vmul.f32 %v308, %v312
    %vm314 = vweird.f32 %v297
    %vm315 = vweird.f32 %v308
    %vm316 = vmor %vm314, %vm315
    %v317 = vsel %vm316, %v308, %v313
    %v318 = vmul.f32 %v252, %v307
    %v319 = vmul.f32 %v253, %v317
    %v320 = vmul.f32 %v286, %v318
    %v321 = vmul.f32 %v287, %v319
    %v322 = vsub.f32 %v254, %v320
    %v323 = vsub.f32 %v255, %v321
    %325 = vset.pattern.permute.xlu0 0
    %326 = vperm.xlu0 %325, %v318
    %v327 = vpop.permute.xlu0 %326
    %330 = vset.pattern.permute.xlu0 0
    %331 = vperm.xlu0 %330, %v319
    %v332 = vpop.permute.xlu0 %331
    %v334 = vmul.f32 %v224, %v327
    %v335 = vmul.f32 %v247, %v327
    %v336 = vmul.f32 %v227, %v332
    %v337 = vmul.f32 %v250, %v332
    %339 = vset.pattern.permute.xlu0 0
    %340 = vperm.xlu0 %339, %v322
    %v341 = vpop.permute.xlu0 %340
    %344 = vset.pattern.permute.xlu0 0
    %345 = vperm.xlu0 %344, %v323
    %v346 = vpop.permute.xlu0 %345
    %v348 = vadd.f32 %v334, %v341
    %v349 = vadd.f32 %v335, %v341
    %v350 = vadd.f32 %v336, %v346
    %v351 = vadd.f32 %v337, %v346
    %v352 = vmax.f32 %v348, 0.0
    %v353 = vmax.f32 %v349, 0.0
    %v354 = vmax.f32 %v350, 0.0
    %v355 = vmax.f32 %v351, 0.0
    %v356 = vmul.f32 %v352, %v257
    %v357 = vmul.f32 %v353, %v258
    %v358 = vmul.f32 %v354, %v257
    %v359 = vmul.f32 %v355, %v258
    %364 = vrot.lane.b32.xlu0 %v356, 127
    %v365 = vpop.permute.xlu0 %364
    %366 = vrot.lane.b32.xlu0 %v357, 127
    %v367 = vpop.permute.xlu0 %366
    %368 = vrot.lane.b32.xlu0 %v358, 127
    %v369 = vpop.permute.xlu0 %368
    %370 = vrot.lane.b32.xlu0 %v359, 127
    %v371 = vpop.permute.xlu0 %370
    %v372 = vsel %vm115, %v365, %v367
    %v373 = vsel %vm115, %v369, %v371
    %376 = vrot.lane.b32.xlu0 %v356, 126
    %v377 = vpop.permute.xlu0 %376
    %378 = vrot.lane.b32.xlu0 %v357, 126
    %v379 = vpop.permute.xlu0 %378
    %380 = vrot.lane.b32.xlu0 %v358, 126
    %v381 = vpop.permute.xlu0 %380
    %382 = vrot.lane.b32.xlu0 %v359, 126
    %v383 = vpop.permute.xlu0 %382
    %v384 = vsel %vm130, %v377, %v379
    %v385 = vsel %vm130, %v381, %v383
    %388 = vrot.lane.b32.xlu0 %v356, 125
    %v389 = vpop.permute.xlu0 %388
    %390 = vrot.lane.b32.xlu0 %v357, 125
    %v391 = vpop.permute.xlu0 %390
    %392 = vrot.lane.b32.xlu0 %v358, 125
    %v393 = vpop.permute.xlu0 %392
    %394 = vrot.lane.b32.xlu0 %v359, 125
    %v395 = vpop.permute.xlu0 %394
    %v396 = vsel %vm145, %v389, %v391
    %v397 = vsel %vm145, %v393, %v395
    %400 = vrot.lane.b32.xlu0 %v356, 124
    %v401 = vpop.permute.xlu0 %400
    %402 = vrot.lane.b32.xlu0 %v357, 124
    %v403 = vpop.permute.xlu0 %402
    %404 = vrot.lane.b32.xlu0 %v358, 124
    %v405 = vpop.permute.xlu0 %404
    %406 = vrot.lane.b32.xlu0 %v359, 124
    %v407 = vpop.permute.xlu0 %406
    %v408 = vsel %vm160, %v401, %v403
    %v409 = vsel %vm160, %v405, %v407
    %412 = vrot.lane.b32.xlu0 %v356, 123
    %v413 = vpop.permute.xlu0 %412
    %414 = vrot.lane.b32.xlu0 %v357, 123
    %v415 = vpop.permute.xlu0 %414
    %416 = vrot.lane.b32.xlu0 %v358, 123
    %v417 = vpop.permute.xlu0 %416
    %418 = vrot.lane.b32.xlu0 %v359, 123
    %v419 = vpop.permute.xlu0 %418
    %v420 = vsel %vm175, %v413, %v415
    %v421 = vsel %vm175, %v417, %v419
    %424 = vrot.lane.b32.xlu0 %v356, 122
    %v425 = vpop.permute.xlu0 %424
    %426 = vrot.lane.b32.xlu0 %v357, 122
    %v427 = vpop.permute.xlu0 %426
    %428 = vrot.lane.b32.xlu0 %v358, 122
    %v429 = vpop.permute.xlu0 %428
    %430 = vrot.lane.b32.xlu0 %v359, 122
    %v431 = vpop.permute.xlu0 %430
    %v432 = vsel %vm190, %v425, %v427
    %v433 = vsel %vm190, %v429, %v431
    %v436 = vld [vmem:[#allocation5] sm:$0xff]
    %v437 = vld [vmem:[#allocation5 + $0x8] sm:$0xff]
    %v439 = vsel %vm199, %v436, 0
    %v442 = vsel %vm199, %v437, 0
    %444 = vmatpush.msra.mxu0 0.0
    %445 = vmatpush.msra.mxu0 0.0
    %446 = vmatpush.msra.mxu0 %v433
    %447 = vmatpush.msra.mxu0 %v432
    %448 = vmatpush.msra.mxu0 %v421
    %449 = vmatpush.msra.mxu0 %v420
    %450 = vmatpush.msra.mxu0 %v409
    %451 = vmatpush.msra.mxu0 %v408
    %452 = vmatpush.msra.mxu0 %v397
    %453 = vmatpush.msra.mxu0 %v396
    %454 = vmatpush.msra.mxu0 %v385
    %455 = vmatpush.msra.mxu0 %v384
    %456 = vmatpush.msra.mxu0 %v373
    %457 = vmatpush.msra.mxu0 %v372
    %458 = vmatpush.msra.mxu0 %v358
    %459 = vmatpush.msra.mxu0 %v356
    %460 = vmatmul.f32.gmra.mxu0 %v439
    %v461 = vpop.f32.mrf.mxu0
    %v462 = vadd.f32 0.0, %v461
    %463 = vmatmul.f32.gmra.mxu0 %v442
    %v464 = vpop.f32.mrf.mxu0
    %v465 = vadd.f32 0.0, %v464
    %466 = vdwg.mxu0
    %v467 = vld [vmem:[%s6] sm:$0xff]
    %v468 = vld [vmem:[%s6 + $0x8] sm:$0xff]
    %v469 = vld [vmem:[%s7] sm:$0xff]
    %v470 = vld [vmem:[%s7 + $0x8] sm:$0xff]
    %v472 = vperm.slane %v102, 0
    %v474 = vmul.f32 %v462, %v472
    %v475 = vmul.f32 %v465, %v472
    %476 = vadd.xlane.f32.xlu0 %v474
    %v477 = vpop.xlane.xlu0 %476
    %478 = vadd.xlane.f32.xlu0 %v475
    %v479 = vpop.xlane.xlu0 %478
    %v480 = vmul.f32 %v474, %v462
    %v481 = vmul.f32 %v475, %v465
    %482 = vadd.xlane.f32.xlu0 %v480
    %v483 = vpop.xlane.xlu0 %482
    %484 = vadd.xlane.f32.xlu0 %v481
    %v485 = vpop.xlane.xlu0 %484
    %v486 = vmul.f32 %v477, 0.0625
    %v487 = vmul.f32 %v479, 0.0625
    %v488 = vmul.f32 %v483, 0.0625
    %v489 = vmul.f32 %v485, 0.0625
    %v490 = vmul.f32 %v486, %v486
    %v491 = vmul.f32 %v487, %v487
    %v492 = vsub.f32 %v488, %v490
    %v493 = vsub.f32 %v489, %v491
    %v494 = vmax.f32 %v492, 0.0
    %v495 = vmax.f32 %v493, 0.0
    %v496 = vadd.f32 %v494, 1e-05
    %v497 = vadd.f32 %v495, 1e-05
    %v498 = vrsqrt.pop %v496
    %v499 = vmul.f32 %v498, %v496
    %v500 = vmul.f32 %v499, %v498
    %v501 = vmul.f32 0.5, %v500
    %v502 = vsub.f32 1.5, %v501
    %v503 = vmul.f32 %v498, %v502
    %vm504 = vweird.f32 %v496
    %vm505 = vweird.f32 %v498
    %vm506 = vmor %vm504, %vm505
    %v507 = vsel %vm506, %v498, %v503
    %v508 = vrsqrt.pop %v497
    %v509 = vmul.f32 %v508, %v497
    %v510 = vmul.f32 %v509, %v508
    %v511 = vmul.f32 0.5, %v510
    %v512 = vsub.f32 1.5, %v511
    %v513 = vmul.f32 %v508, %v512
    %vm514 = vweird.f32 %v497
    %vm515 = vweird.f32 %v508
    %vm516 = vmor %vm514, %vm515
    %v517 = vsel %vm516, %v508, %v513
    %v518 = vmul.f32 %v467, %v507
    %v519 = vmul.f32 %v468, %v517
    %v520 = vmul.f32 %v486, %v518
    %v521 = vmul.f32 %v487, %v519
    %v522 = vsub.f32 %v469, %v520
    %v523 = vsub.f32 %v470, %v521
    %s524 = smul.u32 16, 1
    %s525 = sshll.u32 %s524, 4
    %526 = dma.done %s72, %s525
    %v527 = vld [vmem:[#allocation3] sm:$0xff]
    %v528 = vld [vmem:[#allocation3 + $0x8] sm:$0xff]
    %530 = vset.pattern.permute.xlu0 0
    %531 = vperm.xlu0 %530, %v518
    %v532 = vpop.permute.xlu0 %531
    %535 = vset.pattern.permute.xlu0 0
    %536 = vperm.xlu0 %535, %v519
    %v537 = vpop.permute.xlu0 %536
    %v539 = vmul.f32 %v462, %v532
    %v540 = vmul.f32 %v465, %v537
    %v541 = vadd.f32 %v527, %v539
    %v542 = vadd.f32 %v528, %v540
    %544 = vset.pattern.permute.xlu0 0
    %545 = vperm.xlu0 %544, %v522
    %v546 = vpop.permute.xlu0 %545
    %549 = vset.pattern.permute.xlu0 0
    %550 = vperm.xlu0 %549, %v523
    %v551 = vpop.permute.xlu0 %550
    %v553 = vadd.f32 %v541, %v546
    %v554 = vadd.f32 %v542, %v551
    %v555 = vmax.f32 %v553, 0.0
    %v556 = vmax.f32 %v554, 0.0
    %557 = vst [vmem:[#allocation8] sm:$0xff] %v555
    %558 = vst [vmem:[#allocation8 + $0x8] sm:$0xff] %v556
    // Predicated region
    $region76: #{tpu_custom_call.1} parent=1 // pred_check
      _
    $region77: #{tpu_custom_call.1} parent=1 // pred_check_branch
      %560 = sbr.rel (0) target = $region79
    $region78: #{tpu_custom_call.1} parent=1 // pred_region
      %562 = vsyncadd [#allocation7], 0
      %s563 = sshll.u32 [#allocation8], 4
      %s564 = int_to_ptr.vmem [resolvable:$true] %s563
      %s565 = sshll.u32 %s10, 4
      %s566 = int_to_ptr.hbm [resolvable:$true] %s565
      %571 = dma.vmem_to_hbm [thread:$0]  %s564, 256, %s566, [#allocation7], 128, 128, 8
    $region79: #{tpu_custom_call.1} parent=1 // pred_fallthru
      _
    // Predicated region
    $region80: #{tpu_custom_call.1} parent=1 // pred_check
      _
    $region81: #{tpu_custom_call.1} parent=1 // pred_check_branch
      %573 = sbr.rel (0) target = $region83
    $region82: #{tpu_custom_call.1} parent=1 // pred_region
      %575 = dma.done [#allocation7], 256
    $region83: #{tpu_custom_call.1} parent=1 // pred_fallthru
      _
    %576 = vsyncpa [#allocation6], 1
    %577 = vsyncpa [#allocation7], 1
  %578 = vsyncmov [#allocation4]
  %s579 = vpop.sfrf %578
  %p580 = scmp.eq.s32.totalorder %s579, 0
  %p581 = pneg %p580
  %583 = shalt.err (%p581)
  %s584 = scalar_lea.sflag [#allocation4], 1
  %585 = vsyncmov %s584
  %s586 = vpop.sfrf %585
  %p587 = scmp.eq.s32.totalorder %s586, 0
  %p588 = pneg %p587
  %590 = shalt.err (%p588)

</llo_original>
